<compile_context>
chip_gen: v6e
topology: v6e:2x2x1
jax: 0.10.0
libtpu: 0.0.40
codegen_flags: <defaults>
</compile_context>

<pallas_src>
import functools
import math

import jax
import jax.numpy as jnp
from jax.experimental import pallas as pl
from jax.experimental.pallas import tpu as pltpu


def _round_up(x, m):
    return ((x + m - 1) // m) * m


# ----------------------------------------------------------------------------
# Fused Conv1d (stride) + bias + LeakyReLU kernel (polyphase, tap-accumulation)
# ----------------------------------------------------------------------------
_HALO = 128  # aligned over-read along the polyphase axis; covers q <= ceil(K/S)-1


def _conv1d_tap_kernel(x_ref, w_ref, b_ref, o_ref, *, K, S, TL, C_in, C_out,
                       qmax, slope):
    i = pl.program_id(1)
    base = pl.multiple_of(i * TL, 128)            # lane-aligned dynamic start
    acc = jnp.zeros((C_out, TL), jnp.float32)
    for r in range(S):                            # unrolled: stride phases
        # aligned window [base, base + TL + HALO) of phase r -> (C_in, TL+HALO)
        win = x_ref[0, r, :, pl.ds(base, TL + _HALO)]
        for q in range(qmax):                     # unrolled: taps of this phase
            k = q * S + r
            if k >= K:
                continue
            xs = win[:, q:q + TL]                 # static small lane shift
            wk = w_ref[k]                         # (C_out, C_in)
            if C_in == 1:
                # degenerate contraction -> VPU broadcast MAC (skip the MXU)
                acc = acc + wk.astype(jnp.float32) * xs.astype(jnp.float32)
            else:
                acc = acc + jnp.dot(wk, xs, preferred_element_type=jnp.float32)
    acc = acc + b_ref[...]                        # (C_out, 1) broadcast
    acc = jnp.where(acc >= 0.0, acc, slope * acc)
    o_ref[0] = acc.astype(o_ref.dtype)


def conv1d_leaky(x, w, b, stride, padding, *, slope=0.2, tile_l=2048,
                 compute_dtype=None):
    """LeakyReLU(conv1d(x, w, b)).  x: (N, C_in, L) -> (N, C_out, L_out), NCW."""
    N, C_in, L = x.shape
    C_out, _, K = w.shape
    S = stride
    L_out = (L + 2 * padding - K) // S + 1
    qmax = -(-K // S)                             # ceil(K / S)

    TL = min(tile_l, _round_up(L_out, 128))       # lane-dense output tile
    L_out_pad = _round_up(L_out, TL)
    M_total = L_out_pad + _HALO                   # polyphase length (mult of 128)
    L_need = S * M_total

    # Zero-pad raw input (left: conv padding; right: conv padding + tile slack).
    x_pad = jnp.pad(x, ((0, 0), (0, 0), (padding, L_need - L - padding)))
    # Polyphase layout: (N, C_in, M, S) -> (N, S, C_in, M).
    x_poly = x_pad.reshape(N, C_in, M_total, S).transpose(0, 3, 1, 2)
    w_t = jnp.transpose(w, (2, 0, 1))             # (K, C_out, C_in)
    b2 = b.reshape(C_out, 1).astype(jnp.float32)

    if compute_dtype is not None:
        x_poly = x_poly.astype(compute_dtype)
        w_t = w_t.astype(compute_dtype)

    kernel = functools.partial(_conv1d_tap_kernel, K=K, S=S, TL=TL, C_in=C_in,
                               C_out=C_out, qmax=qmax, slope=slope)
    out = pl.pallas_call(
        kernel,
        out_shape=jax.ShapeDtypeStruct((N, C_out, L_out_pad), x.dtype),
        grid_spec=pltpu.PrefetchScalarGridSpec(
            num_scalar_prefetch=0,
            grid=(N, L_out_pad // TL),
            in_specs=[
                # whole per-batch polyphase input stays resident in VMEM
                pl.BlockSpec((1, S, C_in, M_total), lambda n, i: (n, 0, 0, 0)),
                pl.BlockSpec((K, C_out, C_in), lambda n, i: (0, 0, 0)),
                pl.BlockSpec((C_out, 1), lambda n, i: (0, 0)),
            ],
            # lane-dense NCW output tile: C_out on sublanes, TL (>=128) on lanes
            out_specs=pl.BlockSpec((1, C_out, TL), lambda n, i: (n, 0, i)),
        ),
        compiler_params=pltpu.CompilerParams(
            dimension_semantics=("parallel", "parallel"),
            vmem_limit_bytes=32 * 1024 * 1024,
        ),
    )(x_poly, w_t, b2)
    return out[:, :, :L_out]


# ----------------------------------------------------------------------------
# Final Flatten -> Linear(feat, 1) -> Sigmoid as a small reduction kernel
# (no degenerate 1-lane MXU matmul; VPU multiply + lane reduction + EUP exp)
# ----------------------------------------------------------------------------
def _linear_sigmoid_kernel(x_ref, w_ref, b_ref, o_ref):
    prod = x_ref[...].astype(jnp.float32) * w_ref[...].astype(jnp.float32)
    s = jnp.sum(prod, axis=-1, keepdims=True) + b_ref[...]
    o_ref[...] = (1.0 / (1.0 + jnp.exp(-s))).astype(o_ref.dtype)


def linear_sigmoid(xf, w, b):
    """sigmoid(xf @ w + b).  xf: (N, F), w: (F, 1), b: (1,) -> (N, 1)."""
    Nb, F = xf.shape
    w_row = w.reshape(1, F)
    b2 = b.reshape(1, 1).astype(jnp.float32)
    return pl.pallas_call(
        _linear_sigmoid_kernel,
        out_shape=jax.ShapeDtypeStruct((Nb, 1), xf.dtype),
        grid_spec=pltpu.PrefetchScalarGridSpec(
            num_scalar_prefetch=0,
            grid=(1,),
            in_specs=[
                pl.BlockSpec((Nb, F), lambda i: (0, 0)),
                pl.BlockSpec((1, F), lambda i: (0, 0)),
                pl.BlockSpec((1, 1), lambda i: (0, 0)),
            ],
            out_specs=pl.BlockSpec((Nb, 1), lambda i: (0, 0)),
        ),
        compiler_params=pltpu.CompilerParams(dimension_semantics=("arbitrary",)),
    )(xf, w_row, b2)


# ----------------------------------------------------------------------------
# Deterministic parameter init (PyTorch-like kaiming/uniform bounds)
# ----------------------------------------------------------------------------
_CONV_CFG = [
    # (C_in, C_out, K, stride, pad) — as in DEPR_WaveGANDiscriminator
    (1, 16, 18, 4, 7),
    (16, 32, 18, 4, 7),
    (32, 64, 13, 4, 7),
    (64, 128, 18, 4, 8),
]


def init_params(key, audio_dim):
    keys = jax.random.split(key, 2 * len(_CONV_CFG) + 2)
    params = {"conv": []}
    L = audio_dim
    for i, (ci, co, k, s, p) in enumerate(_CONV_CFG):
        fan_in = ci * k
        gain = math.sqrt(2.0 / (1.0 + 0.2 * 0.2))
        wb = gain * math.sqrt(3.0 / fan_in)
        w = jax.random.uniform(keys[2 * i], (co, ci, k), jnp.float32, -wb, wb)
        bb = 1.0 / math.sqrt(fan_in)
        b = jax.random.uniform(keys[2 * i + 1], (co,), jnp.float32, -bb, bb)
        params["conv"].append((w, b, s, p))
        L = (L + 2 * p - k) // s + 1
    feat = 128 * L  # matches nn.Linear(128 * L_final, 1)
    fb = 1.0 / math.sqrt(feat)
    params["fc_w"] = jax.random.uniform(keys[-2], (feat, 1), jnp.float32, -fb, fb)
    params["fc_b"] = jax.random.uniform(keys[-1], (1,), jnp.float32, -fb, fb)
    return params


# ----------------------------------------------------------------------------
# Forward passes (Pallas and pure-JAX reference)
# ----------------------------------------------------------------------------
def forward(params, x, compute_dtype=None):
    for (w, b, s, p) in params["conv"]:
        x = conv1d_leaky(x, w, b, s, p, slope=0.2, compute_dtype=compute_dtype)
    xf = x.reshape(x.shape[0], -1)                 # nn.Flatten: (N, C*L)
    return linear_sigmoid(xf, params["fc_w"], params["fc_b"])


def forward_ref(params, x):
    for (w, b, s, p) in params["conv"]:
        y = jax.lax.conv_general_dilated(
            x, w, window_strides=(s,), padding=[(p, p)],
            dimension_numbers=("NCH", "OIH", "NCH"))
        x = jax.nn.leaky_relu(y + b[None, :, None], negative_slope=0.2)
    xf = x.reshape(x.shape[0], -1)
    return jax.nn.sigmoid(xf @ params["fc_w"] + params["fc_b"])


if __name__ == "__main__":
    key = jax.random.PRNGKey(0)
    k_param, k_x = jax.random.split(key)

    # Small shapes consistent with the module: batch=2, num_channels=1,
    # audio_dim=1024 (the 190000 original is just a longer L axis).
    batch, num_channels, audio_dim = 2, 1, 1024
    params = init_params(k_param, audio_dim)
    x = jax.random.normal(k_x, (batch, num_channels, audio_dim), jnp.float32)

    out = forward(params, x)            # f32 end-to-end (bf16 optional on v6e/v7x)
    out = jax.block_until_ready(out)
    assert out.shape == (batch, 1), out.shape

    ref = jax.block_until_ready(forward_ref(params, x))
    assert jnp.allclose(out, ref, rtol=5e-4, atol=1e-5), (out, ref)

    print("KERNEL_OK")
</pallas_src>

<mosaic_0001>
module attributes {stable_mosaic.version = 11 : i64} {
  func.func @_conv1d_tap_kernel(%arg0: i32, %arg1: i32, %arg2: memref<1x4x1x384xf32, #tpu.memory_space<vmem>>, %arg3: memref<18x16x1xf32, #tpu.memory_space<vmem>>, %arg4: memref<16x1xf32, #tpu.memory_space<vmem>>, %arg5: memref<1x16x256xf32, #tpu.memory_space<vmem>>) attributes {dimension_semantics = [#tpu.dimension_semantics<parallel>, #tpu.dimension_semantics<parallel>], iteration_bounds = array<i64: 2, 1>, scalar_prefetch = 0 : i64, scratch_operands = 0 : i64, tpu.core_type = #tpu.core_type<tc>, window_params = [{transform_indices = @transform_0, window_bounds = array<i64: 1, 4, 1, 384>}, {pipeline_mode = #tpu.pipeline_mode<synchronous>, transform_indices = @transform_1, window_bounds = array<i64: 18, 16, 1>}, {pipeline_mode = #tpu.pipeline_mode<synchronous>, transform_indices = @transform_2, window_bounds = array<i64: 16, 1>}, {transform_indices = @transform_3, window_bounds = array<i64: 1, 16, 256>}]} {
    %c256_i32 = arith.constant 256 : i32
    %0 = arith.muli %arg1, %c256_i32 : i32
    %1 = tpu.assume_multiple %0, 128 : i32
    %cst = arith.constant 0.000000e+00 : f32
    %2 = vector.broadcast %cst : f32 to vector<16x256xf32>
    %c0 = arith.constant 0 : index
    %c0_0 = arith.constant 0 : index
    %c0_1 = arith.constant 0 : index
    %3 = arith.index_cast %1 : i32 to index
    %4 = vector.load %arg2[%c0, %c0_0, %c0_1, %3] : memref<1x4x1x384xf32, #tpu.memory_space<vmem>>, vector<1x1x1x384xf32>
    %5 = vector.shape_cast %4 : vector<1x1x1x384xf32> to vector<1x384xf32>
    %6 = vector.extract_strided_slice %5 {offsets = [0, 0], sizes = [1, 256], strides = [1, 1]} : vector<1x384xf32> to vector<1x256xf32>
    %c0_2 = arith.constant 0 : index
    %c0_3 = arith.constant 0 : index
    %c0_4 = arith.constant 0 : index
    %7 = vector.load %arg3[%c0_2, %c0_3, %c0_4] : memref<18x16x1xf32, #tpu.memory_space<vmem>>, vector<1x16x1xf32>
    %8 = vector.shape_cast %7 : vector<1x16x1xf32> to vector<16x1xf32>
    %9 = vector.broadcast %8 : vector<16x1xf32> to vector<16x256xf32>
    %10 = vector.broadcast %6 : vector<1x256xf32> to vector<16x256xf32>
    %11 = arith.mulf %9, %10 : vector<16x256xf32>
    %12 = arith.addf %2, %11 : vector<16x256xf32>
    %13 = vector.extract_strided_slice %5 {offsets = [0, 1], sizes = [1, 256], strides = [1, 1]} : vector<1x384xf32> to vector<1x256xf32>
    %c4 = arith.constant 4 : index
    %c0_5 = arith.constant 0 : index
    %c0_6 = arith.constant 0 : index
    %14 = vector.load %arg3[%c4, %c0_5, %c0_6] : memref<18x16x1xf32, #tpu.memory_space<vmem>>, vector<1x16x1xf32>
    %15 = vector.shape_cast %14 : vector<1x16x1xf32> to vector<16x1xf32>
    %16 = vector.broadcast %15 : vector<16x1xf32> to vector<16x256xf32>
    %17 = vector.broadcast %13 : vector<1x256xf32> to vector<16x256xf32>
    %18 = arith.mulf %16, %17 : vector<16x256xf32>
    %19 = arith.addf %12, %18 : vector<16x256xf32>
    %20 = vector.extract_strided_slice %5 {offsets = [0, 2], sizes = [1, 256], strides = [1, 1]} : vector<1x384xf32> to vector<1x256xf32>
    %c8 = arith.constant 8 : index
    %c0_7 = arith.constant 0 : index
    %c0_8 = arith.constant 0 : index
    %21 = vector.load %arg3[%c8, %c0_7, %c0_8] : memref<18x16x1xf32, #tpu.memory_space<vmem>>, vector<1x16x1xf32>
    %22 = vector.shape_cast %21 : vector<1x16x1xf32> to vector<16x1xf32>
    %23 = vector.broadcast %22 : vector<16x1xf32> to vector<16x256xf32>
    %24 = vector.broadcast %20 : vector<1x256xf32> to vector<16x256xf32>
    %25 = arith.mulf %23, %24 : vector<16x256xf32>
    %26 = arith.addf %19, %25 : vector<16x256xf32>
    %27 = vector.extract_strided_slice %5 {offsets = [0, 3], sizes = [1, 256], strides = [1, 1]} : vector<1x384xf32> to vector<1x256xf32>
    %c12 = arith.constant 12 : index
    %c0_9 = arith.constant 0 : index
    %c0_10 = arith.constant 0 : index
    %28 = vector.load %arg3[%c12, %c0_9, %c0_10] : memref<18x16x1xf32, #tpu.memory_space<vmem>>, vector<1x16x1xf32>
    %29 = vector.shape_cast %28 : vector<1x16x1xf32> to vector<16x1xf32>
    %30 = vector.broadcast %29 : vector<16x1xf32> to vector<16x256xf32>
    %31 = vector.broadcast %27 : vector<1x256xf32> to vector<16x256xf32>
    %32 = arith.mulf %30, %31 : vector<16x256xf32>
    %33 = arith.addf %26, %32 : vector<16x256xf32>
    %34 = vector.extract_strided_slice %5 {offsets = [0, 4], sizes = [1, 256], strides = [1, 1]} : vector<1x384xf32> to vector<1x256xf32>
    %c16 = arith.constant 16 : index
    %c0_11 = arith.constant 0 : index
    %c0_12 = arith.constant 0 : index
    %35 = vector.load %arg3[%c16, %c0_11, %c0_12] : memref<18x16x1xf32, #tpu.memory_space<vmem>>, vector<1x16x1xf32>
    %36 = vector.shape_cast %35 : vector<1x16x1xf32> to vector<16x1xf32>
    %37 = vector.broadcast %36 : vector<16x1xf32> to vector<16x256xf32>
    %38 = vector.broadcast %34 : vector<1x256xf32> to vector<16x256xf32>
    %39 = arith.mulf %37, %38 : vector<16x256xf32>
    %40 = arith.addf %33, %39 : vector<16x256xf32>
    %c0_13 = arith.constant 0 : index
    %c1 = arith.constant 1 : index
    %c0_14 = arith.constant 0 : index
    %41 = arith.index_cast %1 : i32 to index
    %42 = vector.load %arg2[%c0_13, %c1, %c0_14, %41] : memref<1x4x1x384xf32, #tpu.memory_space<vmem>>, vector<1x1x1x384xf32>
    %43 = vector.shape_cast %42 : vector<1x1x1x384xf32> to vector<1x384xf32>
    %44 = vector.extract_strided_slice %43 {offsets = [0, 0], sizes = [1, 256], strides = [1, 1]} : vector<1x384xf32> to vector<1x256xf32>
    %c1_15 = arith.constant 1 : index
    %c0_16 = arith.constant 0 : index
    %c0_17 = arith.constant 0 : index
    %45 = vector.load %arg3[%c1_15, %c0_16, %c0_17] : memref<18x16x1xf32, #tpu.memory_space<vmem>>, vector<1x16x1xf32>
    %46 = vector.shape_cast %45 : vector<1x16x1xf32> to vector<16x1xf32>
    %47 = vector.broadcast %46 : vector<16x1xf32> to vector<16x256xf32>
    %48 = vector.broadcast %44 : vector<1x256xf32> to vector<16x256xf32>
    %49 = arith.mulf %47, %48 : vector<16x256xf32>
    %50 = arith.addf %40, %49 : vector<16x256xf32>
    %51 = vector.extract_strided_slice %43 {offsets = [0, 1], sizes = [1, 256], strides = [1, 1]} : vector<1x384xf32> to vector<1x256xf32>
    %c5 = arith.constant 5 : index
    %c0_18 = arith.constant 0 : index
    %c0_19 = arith.constant 0 : index
    %52 = vector.load %arg3[%c5, %c0_18, %c0_19] : memref<18x16x1xf32, #tpu.memory_space<vmem>>, vector<1x16x1xf32>
    %53 = vector.shape_cast %52 : vector<1x16x1xf32> to vector<16x1xf32>
    %54 = vector.broadcast %53 : vector<16x1xf32> to vector<16x256xf32>
    %55 = vector.broadcast %51 : vector<1x256xf32> to vector<16x256xf32>
    %56 = arith.mulf %54, %55 : vector<16x256xf32>
    %57 = arith.addf %50, %56 : vector<16x256xf32>
    %58 = vector.extract_strided_slice %43 {offsets = [0, 2], sizes = [1, 256], strides = [1, 1]} : vector<1x384xf32> to vector<1x256xf32>
    %c9 = arith.constant 9 : index
    %c0_20 = arith.constant 0 : index
    %c0_21 = arith.constant 0 : index
    %59 = vector.load %arg3[%c9, %c0_20, %c0_21] : memref<18x16x1xf32, #tpu.memory_space<vmem>>, vector<1x16x1xf32>
    %60 = vector.shape_cast %59 : vector<1x16x1xf32> to vector<16x1xf32>
    %61 = vector.broadcast %60 : vector<16x1xf32> to vector<16x256xf32>
    %62 = vector.broadcast %58 : vector<1x256xf32> to vector<16x256xf32>
    %63 = arith.mulf %61, %62 : vector<16x256xf32>
    %64 = arith.addf %57, %63 : vector<16x256xf32>
    %65 = vector.extract_strided_slice %43 {offsets = [0, 3], sizes = [1, 256], strides = [1, 1]} : vector<1x384xf32> to vector<1x256xf32>
    %c13 = arith.constant 13 : index
    %c0_22 = arith.constant 0 : index
    %c0_23 = arith.constant 0 : index
    %66 = vector.load %arg3[%c13, %c0_22, %c0_23] : memref<18x16x1xf32, #tpu.memory_space<vmem>>, vector<1x16x1xf32>
    %67 = vector.shape_cast %66 : vector<1x16x1xf32> to vector<16x1xf32>
    %68 = vector.broadcast %67 : vector<16x1xf32> to vector<16x256xf32>
    %69 = vector.broadcast %65 : vector<1x256xf32> to vector<16x256xf32>
    %70 = arith.mulf %68, %69 : vector<16x256xf32>
    %71 = arith.addf %64, %70 : vector<16x256xf32>
    %72 = vector.extract_strided_slice %43 {offsets = [0, 4], sizes = [1, 256], strides = [1, 1]} : vector<1x384xf32> to vector<1x256xf32>
    %c17 = arith.constant 17 : index
    %c0_24 = arith.constant 0 : index
    %c0_25 = arith.constant 0 : index
    %73 = vector.load %arg3[%c17, %c0_24, %c0_25] : memref<18x16x1xf32, #tpu.memory_space<vmem>>, vector<1x16x1xf32>
    %74 = vector.shape_cast %73 : vector<1x16x1xf32> to vector<16x1xf32>
    %75 = vector.broadcast %74 : vector<16x1xf32> to vector<16x256xf32>
    %76 = vector.broadcast %72 : vector<1x256xf32> to vector<16x256xf32>
    %77 = arith.mulf %75, %76 : vector<16x256xf32>
    %78 = arith.addf %71, %77 : vector<16x256xf32>
    %c0_26 = arith.constant 0 : index
    %c2 = arith.constant 2 : index
    %c0_27 = arith.constant 0 : index
    %79 = arith.index_cast %1 : i32 to index
    %80 = vector.load %arg2[%c0_26, %c2, %c0_27, %79] : memref<1x4x1x384xf32, #tpu.memory_space<vmem>>, vector<1x1x1x384xf32>
    %81 = vector.shape_cast %80 : vector<1x1x1x384xf32> to vector<1x384xf32>
    %82 = vector.extract_strided_slice %81 {offsets = [0, 0], sizes = [1, 256], strides = [1, 1]} : vector<1x384xf32> to vector<1x256xf32>
    %c2_28 = arith.constant 2 : index
    %c0_29 = arith.constant 0 : index
    %c0_30 = arith.constant 0 : index
    %83 = vector.load %arg3[%c2_28, %c0_29, %c0_30] : memref<18x16x1xf32, #tpu.memory_space<vmem>>, vector<1x16x1xf32>
    %84 = vector.shape_cast %83 : vector<1x16x1xf32> to vector<16x1xf32>
    %85 = vector.broadcast %84 : vector<16x1xf32> to vector<16x256xf32>
    %86 = vector.broadcast %82 : vector<1x256xf32> to vector<16x256xf32>
    %87 = arith.mulf %85, %86 : vector<16x256xf32>
    %88 = arith.addf %78, %87 : vector<16x256xf32>
    %89 = vector.extract_strided_slice %81 {offsets = [0, 1], sizes = [1, 256], strides = [1, 1]} : vector<1x384xf32> to vector<1x256xf32>
    %c6 = arith.constant 6 : index
    %c0_31 = arith.constant 0 : index
    %c0_32 = arith.constant 0 : index
    %90 = vector.load %arg3[%c6, %c0_31, %c0_32] : memref<18x16x1xf32, #tpu.memory_space<vmem>>, vector<1x16x1xf32>
    %91 = vector.shape_cast %90 : vector<1x16x1xf32> to vector<16x1xf32>
    %92 = vector.broadcast %91 : vector<16x1xf32> to vector<16x256xf32>
    %93 = vector.broadcast %89 : vector<1x256xf32> to vector<16x256xf32>
    %94 = arith.mulf %92, %93 : vector<16x256xf32>
    %95 = arith.addf %88, %94 : vector<16x256xf32>
    %96 = vector.extract_strided_slice %81 {offsets = [0, 2], sizes = [1, 256], strides = [1, 1]} : vector<1x384xf32> to vector<1x256xf32>
    %c10 = arith.constant 10 : index
    %c0_33 = arith.constant 0 : index
    %c0_34 = arith.constant 0 : index
    %97 = vector.load %arg3[%c10, %c0_33, %c0_34] : memref<18x16x1xf32, #tpu.memory_space<vmem>>, vector<1x16x1xf32>
    %98 = vector.shape_cast %97 : vector<1x16x1xf32> to vector<16x1xf32>
    %99 = vector.broadcast %98 : vector<16x1xf32> to vector<16x256xf32>
    %100 = vector.broadcast %96 : vector<1x256xf32> to vector<16x256xf32>
    %101 = arith.mulf %99, %100 : vector<16x256xf32>
    %102 = arith.addf %95, %101 : vector<16x256xf32>
    %103 = vector.extract_strided_slice %81 {offsets = [0, 3], sizes = [1, 256], strides = [1, 1]} : vector<1x384xf32> to vector<1x256xf32>
    %c14 = arith.constant 14 : index
    %c0_35 = arith.constant 0 : index
    %c0_36 = arith.constant 0 : index
    %104 = vector.load %arg3[%c14, %c0_35, %c0_36] : memref<18x16x1xf32, #tpu.memory_space<vmem>>, vector<1x16x1xf32>
    %105 = vector.shape_cast %104 : vector<1x16x1xf32> to vector<16x1xf32>
    %106 = vector.broadcast %105 : vector<16x1xf32> to vector<16x256xf32>
    %107 = vector.broadcast %103 : vector<1x256xf32> to vector<16x256xf32>
    %108 = arith.mulf %106, %107 : vector<16x256xf32>
    %109 = arith.addf %102, %108 : vector<16x256xf32>
    %c0_37 = arith.constant 0 : index
    %c3 = arith.constant 3 : index
    %c0_38 = arith.constant 0 : index
    %110 = arith.index_cast %1 : i32 to index
    %111 = vector.load %arg2[%c0_37, %c3, %c0_38, %110] : memref<1x4x1x384xf32, #tpu.memory_space<vmem>>, vector<1x1x1x384xf32>
    %112 = vector.shape_cast %111 : vector<1x1x1x384xf32> to vector<1x384xf32>
    %113 = vector.extract_strided_slice %112 {offsets = [0, 0], sizes = [1, 256], strides = [1, 1]} : vector<1x384xf32> to vector<1x256xf32>
    %c3_39 = arith.constant 3 : index
    %c0_40 = arith.constant 0 : index
    %c0_41 = arith.constant 0 : index
    %114 = vector.load %arg3[%c3_39, %c0_40, %c0_41] : memref<18x16x1xf32, #tpu.memory_space<vmem>>, vector<1x16x1xf32>
    %115 = vector.shape_cast %114 : vector<1x16x1xf32> to vector<16x1xf32>
    %116 = vector.broadcast %115 : vector<16x1xf32> to vector<16x256xf32>
    %117 = vector.broadcast %113 : vector<1x256xf32> to vector<16x256xf32>
    %118 = arith.mulf %116, %117 : vector<16x256xf32>
    %119 = arith.addf %109, %118 : vector<16x256xf32>
    %120 = vector.extract_strided_slice %112 {offsets = [0, 1], sizes = [1, 256], strides = [1, 1]} : vector<1x384xf32> to vector<1x256xf32>
    %c7 = arith.constant 7 : index
    %c0_42 = arith.constant 0 : index
    %c0_43 = arith.constant 0 : index
    %121 = vector.load %arg3[%c7, %c0_42, %c0_43] : memref<18x16x1xf32, #tpu.memory_space<vmem>>, vector<1x16x1xf32>
    %122 = vector.shape_cast %121 : vector<1x16x1xf32> to vector<16x1xf32>
    %123 = vector.broadcast %122 : vector<16x1xf32> to vector<16x256xf32>
    %124 = vector.broadcast %120 : vector<1x256xf32> to vector<16x256xf32>
    %125 = arith.mulf %123, %124 : vector<16x256xf32>
    %126 = arith.addf %119, %125 : vector<16x256xf32>
    %127 = vector.extract_strided_slice %112 {offsets = [0, 2], sizes = [1, 256], strides = [1, 1]} : vector<1x384xf32> to vector<1x256xf32>
    %c11 = arith.constant 11 : index
    %c0_44 = arith.constant 0 : index
    %c0_45 = arith.constant 0 : index
    %128 = vector.load %arg3[%c11, %c0_44, %c0_45] : memref<18x16x1xf32, #tpu.memory_space<vmem>>, vector<1x16x1xf32>
    %129 = vector.shape_cast %128 : vector<1x16x1xf32> to vector<16x1xf32>
    %130 = vector.broadcast %129 : vector<16x1xf32> to vector<16x256xf32>
    %131 = vector.broadcast %127 : vector<1x256xf32> to vector<16x256xf32>
    %132 = arith.mulf %130, %131 : vector<16x256xf32>
    %133 = arith.addf %126, %132 : vector<16x256xf32>
    %134 = vector.extract_strided_slice %112 {offsets = [0, 3], sizes = [1, 256], strides = [1, 1]} : vector<1x384xf32> to vector<1x256xf32>
    %c15 = arith.constant 15 : index
    %c0_46 = arith.constant 0 : index
    %c0_47 = arith.constant 0 : index
    %135 = vector.load %arg3[%c15, %c0_46, %c0_47] : memref<18x16x1xf32, #tpu.memory_space<vmem>>, vector<1x16x1xf32>
    %136 = vector.shape_cast %135 : vector<1x16x1xf32> to vector<16x1xf32>
    %137 = vector.broadcast %136 : vector<16x1xf32> to vector<16x256xf32>
    %138 = vector.broadcast %134 : vector<1x256xf32> to vector<16x256xf32>
    %139 = arith.mulf %137, %138 : vector<16x256xf32>
    %140 = arith.addf %133, %139 : vector<16x256xf32>
    %c0_48 = arith.constant 0 : index
    %c0_49 = arith.constant 0 : index
    %141 = vector.load %arg4[%c0_48, %c0_49] : memref<16x1xf32, #tpu.memory_space<vmem>>, vector<16x1xf32>
    %142 = vector.broadcast %141 : vector<16x1xf32> to vector<16x256xf32>
    %143 = arith.addf %140, %142 : vector<16x256xf32>
    %cst_50 = arith.constant 0.000000e+00 : f32
    %144 = vector.broadcast %cst_50 : f32 to vector<16x256xf32>
    %145 = arith.cmpf oge, %143, %144 : vector<16x256xf32>
    %cst_51 = arith.constant 2.000000e-01 : f32
    %146 = vector.broadcast %cst_51 : f32 to vector<16x256xf32>
    %147 = arith.mulf %146, %143 : vector<16x256xf32>
    %148 = arith.select %145, %143, %147 : vector<16x256xi1>, vector<16x256xf32>
    %c0_52 = arith.constant 0 : index
    %c0_53 = arith.constant 0 : index
    %c0_54 = arith.constant 0 : index
    %149 = vector.load %arg5[%c0_52, %c0_53, %c0_54] : memref<1x16x256xf32, #tpu.memory_space<vmem>>, vector<1x16x256xf32>
    %150 = vector.shape_cast %149 : vector<1x16x256xf32> to vector<16x256xf32>
    %151 = vector.shape_cast %148 : vector<16x256xf32> to vector<1x16x256xf32>
    tpu.vector_store %arg5[%c0_52, %c0_53, %c0_54], %151 {strides = array<i32>} : memref<1x16x256xf32, #tpu.memory_space<vmem>>, vector<1x16x256xf32>,
    return
  }
  func.func @transform_0(%arg0: i32, %arg1: i32) -> (i32, i32, i32, i32) {
    %c0_i32 = arith.constant 0 : i32
    %c0_i32_0 = arith.constant 0 : i32
    %c0_i32_1 = arith.constant 0 : i32
    %c0_i32_2 = arith.constant 0 : i32
    return %arg0, %c0_i32, %c0_i32_0, %c0_i32_1 : i32, i32, i32, i32
  }
  func.func @transform_1(%arg0: i32, %arg1: i32) -> (i32, i32, i32) {
    %c0_i32 = arith.constant 0 : i32
    %c0_i32_0 = arith.constant 0 : i32
    %c0_i32_1 = arith.constant 0 : i32
    %c0_i32_2 = arith.constant 0 : i32
    return %c0_i32, %c0_i32_0, %c0_i32_1 : i32, i32, i32
  }
  func.func @transform_2(%arg0: i32, %arg1: i32) -> (i32, i32) {
    %c0_i32 = arith.constant 0 : i32
    %c0_i32_0 = arith.constant 0 : i32
    %c0_i32_1 = arith.constant 0 : i32
    return %c0_i32, %c0_i32_0 : i32, i32
  }
  func.func @transform_3(%arg0: i32, %arg1: i32) -> (i32, i32, i32) {
    %c0_i32 = arith.constant 0 : i32
    %c0_i32_0 = arith.constant 0 : i32
    return %arg0, %c0_i32, %arg1 : i32, i32, i32
  }
}

</mosaic_0001>

<llo_original>
// kernel: tpu_custom_call.1
$region0: #{tpu_custom_call.1}
  #allocation0 [shape = 'u32[]', space=smem, size = 0x4, offset = 0x4, fixed_abs, tag = 'smem constant byte address 0x4 - core index']
  #allocation1 [shape = 'u32[144,128]{1,0:T(1,128)}', space=vmem, size = 0x12000, scoped, tag = 'internal scratch']
  %s0 = inlined_call_operand.vmem [shape: f32[2,4,1,384], index: 0, kind: input, shape index: {}]
  %s1 = inlined_call_operand.vmem [shape: f32[18,16,1], index: 1, kind: input, shape index: {}]
  %s2 = inlined_call_operand.vmem [shape: f32[16,1], index: 2, kind: input, shape index: {}]
  %s3 = inlined_call_operand.hbm [shape: f32[2,16,256], index: 3, kind: output, shape index: {}]
  %s4 = sld [smem:[#allocation0]]
  $region45: #{tpu_custom_call.1} parent=0
    _
  %s6 = ssub.s32 1, %s4
  %s7 = scalar_select 0, %s6, %s4
  $region1: #{tpu_custom_call.1} parent=0
    #allocation2 [shape = 'u8[32768]{0}', space=vmem, size = 0x8000, scoped, tag = 'output window, operand 0']
    #allocation3 [shape = 's32[2]{0}', space=sflag, size = 0x8, scoped, tag = 'scoped memory for tpu_custom_call.1']
    %8 = vsyncpa [#allocation3], 0
    %s9 = scalar_lea.sflag [#allocation3], 1
    %10 = vsyncpa %s9, 0
    loop: start=0, step=1, limit=4
    $region2: #{tpu_custom_call.1} parent=1 // loop_pre_header
      _
    $region3: #{tpu_custom_call.1} parent=1 // loop_header
      %s12 = sphi 0, %s16
      %p13 = scmp.ge.s32.totalorder %s12, 4
      %s19 = sphi 0, %s31
      %s20 = sphi 0, %s27
      %s21 = sphi 0, %s19
      %s22 = sphi 0, %s20
      %s23 = sphi 0, %s21
      %s24 = sphi 0, %s22
      %s34 = sphi 0, %s36
      %s37 = sphi 0, %s34
      %s38 = sphi 0, %s37
      %s54 = sphi 0, %s38
      %s58 = sphi 0, %s58
      %s60 = sphi 0, %s58
      %s61 = sphi 0, %s60
      %s75 = sphi 0, %s61
      %s79 = sphi 0, %s79
      %s81 = sphi 0, %s79
      %s82 = sphi 0, %s81
      %s96 = sphi 0, %s82
      %s104 = sphi 0, %s106
      %s107 = sphi 0, %s104
      %s108 = sphi 0, %s107
      %s124 = sphi 0, %s108
    $region4: #{tpu_custom_call.1} parent=1 // loop_header_branch
      %15 = sbr.rel (%p13) target = $region8
    $region5: #{tpu_custom_call.1} parent=1 // loop_body
      %s17 = ssub.s32 %s12, 1
      %s18 = ssub.s32 %s12, 2
      %s25 = sadd.s32 1, %s20
      %p26 = scmp.ge.s32.totalorder %s25, 1
      %s27 = scalar_select %p26, 0, %s25
      %s28 = sadd.s32 1, %s19
      %s29 = scalar_select %p26, %s28, %s19
      %p30 = scmp.ge.s32.totalorder %s29, 2
      %s31 = scalar_select %p30, 0, %s29
      %s32 = ssub.s32 %s19, %s31
      %p33 = scmp.eq.s32.totalorder %s32, 0
      %s35 = sadd.s32 %s34, 1
      %s36 = scalar_select %p33, %s34, %s35
      %p39 = pneg %p33
      %p40 = scmp.eq.s32.totalorder %s12, 1
      %p41 = por %p39, %p40
      %p42 = scmp.ne.s32.totalorder %s34, %s37
      %p43 = scmp.eq.s32.totalorder %s12, 0
      %p44 = por %p42, %p43
      %p45 = scmp.ne.s32.totalorder %s34, %s37
      %p46 = scmp.eq.s32.totalorder %s17, 1
      %p47 = por %p45, %p46
      %p48 = scmp.ne.s32.totalorder %s37, %s38
      %p49 = scmp.eq.s32.totalorder %s17, 0
      %p50 = por %p48, %p49
      %p51 = scmp.ne.s32.totalorder %s37, %s38
      %p52 = scmp.eq.s32.totalorder %s18, 1
      %p53 = por %p51, %p52
      %p55 = scmp.ne.s32.totalorder %s38, %s54
      %p56 = scmp.eq.s32.totalorder %s18, 0
      %p57 = por %p55, %p56
      %s59 = sadd.s32 %s58, 1
      %p62 = scmp.eq.s32.totalorder %s12, 1
      %p63 = scmp.ne.s32.totalorder %s58, %s60
      %p64 = scmp.eq.s32.totalorder %s12, 0
      %p65 = por %p63, %p64
      %p66 = scmp.ne.s32.totalorder %s58, %s60
      %p67 = scmp.eq.s32.totalorder %s17, 1
      %p68 = por %p66, %p67
      %p69 = scmp.ne.s32.totalorder %s60, %s61
      %p70 = scmp.eq.s32.totalorder %s17, 0
      %p71 = por %p69, %p70
      %p72 = scmp.ne.s32.totalorder %s60, %s61
      %p73 = scmp.eq.s32.totalorder %s18, 1
      %p74 = por %p72, %p73
      %p76 = scmp.ne.s32.totalorder %s61, %s75
      %p77 = scmp.eq.s32.totalorder %s18, 0
      %p78 = por %p76, %p77
      %s80 = sadd.s32 %s79, 1
      %p83 = scmp.eq.s32.totalorder %s12, 1
      %p84 = scmp.ne.s32.totalorder %s79, %s81
      %p85 = scmp.eq.s32.totalorder %s12, 0
      %p86 = por %p84, %p85
      %p87 = scmp.ne.s32.totalorder %s79, %s81
      %p88 = scmp.eq.s32.totalorder %s17, 1
      %p89 = por %p87, %p88
      %p90 = scmp.ne.s32.totalorder %s81, %s82
      %p91 = scmp.eq.s32.totalorder %s17, 0
      %p92 = por %p90, %p91
      %p93 = scmp.ne.s32.totalorder %s81, %s82
      %p94 = scmp.eq.s32.totalorder %s18, 1
      %p95 = por %p93, %p94
      %p97 = scmp.ne.s32.totalorder %s82, %s96
      %p98 = scmp.eq.s32.totalorder %s18, 0
      %p99 = por %p97, %p98
      %s100 = ssub.s32 %s19, %s31
      %s101 = ssub.s32 %s20, %s27
      %s102 = sor.u32 %s100, %s101
      %p103 = scmp.eq.s32.totalorder %s102, 0
      %s105 = sadd.s32 %s104, 1
      %s106 = scalar_select %p103, %s104, %s105
      %p109 = pneg %p103
      %p110 = scmp.eq.s32.totalorder %s12, 1
      %p111 = por %p109, %p110
      %p112 = scmp.ne.s32.totalorder %s104, %s107
      %p113 = scmp.eq.s32.totalorder %s12, 0
      %p114 = por %p112, %p113
      %p115 = scmp.ne.s32.totalorder %s104, %s107
      %p116 = scmp.eq.s32.totalorder %s17, 1
      %p117 = por %p115, %p116
      %p118 = scmp.ne.s32.totalorder %s107, %s108
      %p119 = scmp.eq.s32.totalorder %s17, 0
      %p120 = por %p118, %p119
      %p121 = scmp.ne.s32.totalorder %s107, %s108
      %p122 = scmp.eq.s32.totalorder %s18, 1
      %p123 = por %p121, %p122
      %p125 = scmp.ne.s32.totalorder %s108, %s124
      %p126 = scmp.eq.s32.totalorder %s18, 0
      %p127 = por %p125, %p126
      %p128 = scmp.le.s32.totalorder 1, %s12
      %p129 = scmp.lt.s32.totalorder %s12, 3
      %p130 = pnand %p128, %p129
      %p131 = pneg %p130
      // Predicated region
      $region9: #{tpu_custom_call.1} parent=5 // pred_check
        _
      $region10: #{tpu_custom_call.1} parent=5 // pred_check_branch
        %133 = sbr.rel (%p130) target = $region12
      $region11: #{tpu_custom_call.1} parent=5 // pred_region
        %s134 = ssub.s32 %s12, 1
        // Predicated region
        $region13: #{tpu_custom_call.1} parent=11 // pred_check
          %p135 = pneg %p71
        $region14: #{tpu_custom_call.1} parent=11 // pred_check_branch
          %137 = sbr.rel (%p135) target = $region16
        $region15: #{tpu_custom_call.1} parent=11 // pred_region
          _
        $region16: #{tpu_custom_call.1} parent=11 // pred_fallthru
          _
        // Predicated region
        $region17: #{tpu_custom_call.1} parent=11 // pred_check
          %p138 = pneg %p92
        $region18: #{tpu_custom_call.1} parent=11 // pred_check_branch
          %140 = sbr.rel (%p138) target = $region20
        $region19: #{tpu_custom_call.1} parent=11 // pred_region
          _
        $region20: #{tpu_custom_call.1} parent=11 // pred_fallthru
          _
      $region12: #{tpu_custom_call.1} parent=5 // pred_fallthru
        _
      %p141 = scmp.lt.s32.totalorder %s12, 2
      // Predicated region
      $region21: #{tpu_custom_call.1} parent=5 // pred_check
        %p142 = pneg %p141
      $region22: #{tpu_custom_call.1} parent=5 // pred_check_branch
        %144 = sbr.rel (%p142) target = $region24
      $region23: #{tpu_custom_call.1} parent=5 // pred_region
        // Predicated region
        $region25: #{tpu_custom_call.1} parent=23 // pred_check
          %p145 = pneg %p44
        $region26: #{tpu_custom_call.1} parent=23 // pred_check_branch
          %147 = sbr.rel (%p145) target = $region28
        $region27: #{tpu_custom_call.1} parent=23 // pred_region
          %p148 = scmp.lt.s32.totalorder %s19, 1
          %s149 = scalar_select %p148, %s19, 1
          %s150 = smul.addr %s149, 12
          %s151 = scalar_lea.vmem %s0, %s150
        $region28: #{tpu_custom_call.1} parent=23 // pred_fallthru
          _
      $region24: #{tpu_custom_call.1} parent=5 // pred_fallthru
        _
      %p152 = scmp.le.s32.totalorder 1, %s12
      %p153 = scmp.lt.s32.totalorder %s12, 3
      %p154 = pnand %p152, %p153
      %p155 = pneg %p154
      // Predicated region
      $region29: #{tpu_custom_call.1} parent=5 // pred_check
        _
      $region30: #{tpu_custom_call.1} parent=5 // pred_check_branch
        %157 = sbr.rel (%p154) target = $region32
      $region31: #{tpu_custom_call.1} parent=5 // pred_region
        %s158 = ssub.s32 %s12, 1
        %p159 = scmp.lt.s32.totalorder %s21, 1
        %s160 = scalar_select %p159, %s21, 1
        %s161 = smul.addr %s160, 12
        %s162 = scalar_lea.vmem %s0, %s161
        %p163 = pneg %p50
        %p164 = pneg %p47
        %p165 = pneg %p71
        %p166 = pneg %p68
        %p167 = pneg %p92
        %p168 = pneg %p89
        %p169 = pneg %p120
        %p170 = pneg %p117
        %s171 = sand.u32 %s107, 1
        %s172 = scalar_lea.sflag [#allocation3], %s171
        %s173 = sand.u32 %s107, 1
        %s174 = smul.addr %s173, 32
        %s175 = scalar_lea.vmem [#allocation2], %s174
        %p176 = scmp.lt.s32.totalorder %s21, 1
        %s177 = scalar_select %p176, %s21, 1
        %s178 = smul.addr %s177, 12
        %s179 = scalar_lea.vmem %s0, %s178
        %s180 = smul.u32 2, %s22
        %s181 = smul.u32 %s22, 256
        %s182 = sshra.s32 %s181, 7
        %s183 = sand.u32 %s181, 127
        %s184 = scalar_lea.vmem %s179, %s182
        %v185 = vld [vmem:[%s184] sm:$0x7]
        %v186 = vld [vmem:[%s1] sm:$0xff]
        %v187 = vld [vmem:[%s1 + $0x8] sm:$0xff]
        %189 = vset.pattern.permute.xlu0 0
        %190 = vperm.xlu0 %189, %v186
        %v191 = vpop.permute.xlu0 %190
        %194 = vset.pattern.permute.xlu0 0
        %195 = vperm.xlu0 %194, %v187
        %v196 = vpop.permute.xlu0 %195
        %v199 = vlaneseq
        %v200 = vshrl.u32 %v199, 7
        %v201 = vsub.s32 0, %v200
        %v202 = vrot.slane %v185, %v201
        %v203 = vlaneseq
        %v204 = vshrl.u32 %v203, 7
        %v205 = vsub.s32 1, %v204
        %v206 = vrot.slane %v185, %v205
        %v209 = vmul.f32 %v191, %v202
        %v210 = vmul.f32 %v191, %v206
        %v211 = vmul.f32 %v196, %v202
        %v212 = vmul.f32 %v196, %v206
        %v213 = vadd.f32 %v209, 0.0
        %v214 = vadd.f32 %v210, 0.0
        %v215 = vadd.f32 %v211, 0.0
        %v216 = vadd.f32 %v212, 0.0
        %s217 = scalar_lea.vmem %s1, 64
        %v218 = vld [vmem:[%s217] sm:$0xff]
        %v219 = vld [vmem:[%s217 + $0x8] sm:$0xff]
        %221 = vset.pattern.permute.xlu0 0
        %222 = vperm.xlu0 %221, %v218
        %v223 = vpop.permute.xlu0 %222
        %226 = vset.pattern.permute.xlu0 0
        %227 = vperm.xlu0 %226, %v219
        %v228 = vpop.permute.xlu0 %227
        %v230 = vlaneseq
        %v231 = vshrl.u32 %v230, 7
        %v232 = vsub.s32 2, %v231
        %v233 = vrot.slane %v185, %v232
        %v235 = vmul.f32 %v223, %v202
        %v236 = vmul.f32 %v223, %v206
        %v237 = vmul.f32 %v223, %v233
        %v238 = vmul.f32 %v228, %v202
        %v239 = vmul.f32 %v228, %v206
        %v240 = vmul.f32 %v228, %v233
        %247 = vrot.lane.b32.xlu0 %v235, 127
        %v248 = vpop.permute.xlu0 %247
        %249 = vrot.lane.b32.xlu0 %v236, 127
        %v250 = vpop.permute.xlu0 %249
        %251 = vrot.lane.b32.xlu0 %v237, 127
        %v252 = vpop.permute.xlu0 %251
        %253 = vrot.lane.b32.xlu0 %v238, 127
        %v254 = vpop.permute.xlu0 %253
        %255 = vrot.lane.b32.xlu0 %v239, 127
        %v256 = vpop.permute.xlu0 %255
        %257 = vrot.lane.b32.xlu0 %v240, 127
        %v258 = vpop.permute.xlu0 %257
        %vm259 = vcmask 1039360
        %v260 = vsel %vm259, %v248, %v250
        %v261 = vsel %vm259, %v250, %v252
        %v262 = vsel %vm259, %v254, %v256
        %v263 = vsel %vm259, %v256, %v258
        %v268 = vadd.f32 %v213, %v260
        %v269 = vadd.f32 %v214, %v261
        %v270 = vadd.f32 %v215, %v262
        %v271 = vadd.f32 %v216, %v263
        %s272 = scalar_lea.vmem %s1, 128
        %v273 = vld [vmem:[%s272] sm:$0xff]
        %v274 = vld [vmem:[%s272 + $0x8] sm:$0xff]
        %276 = vset.pattern.permute.xlu0 0
        %277 = vperm.xlu0 %276, %v273
        %v278 = vpop.permute.xlu0 %277
        %281 = vset.pattern.permute.xlu0 0
        %282 = vperm.xlu0 %281, %v274
        %v283 = vpop.permute.xlu0 %282
        %v285 = vmul.f32 %v278, %v202
        %v286 = vmul.f32 %v278, %v206
        %v287 = vmul.f32 %v278, %v233
        %v288 = vmul.f32 %v283, %v202
        %v289 = vmul.f32 %v283, %v206
        %v290 = vmul.f32 %v283, %v233
        %297 = vrot.lane.b32.xlu0 %v285, 126
        %v298 = vpop.permute.xlu0 %297
        %299 = vrot.lane.b32.xlu0 %v286, 126
        %v300 = vpop.permute.xlu0 %299
        %301 = vrot.lane.b32.xlu0 %v287, 126
        %v302 = vpop.permute.xlu0 %301
        %303 = vrot.lane.b32.xlu0 %v288, 126
        %v304 = vpop.permute.xlu0 %303
        %305 = vrot.lane.b32.xlu0 %v289, 126
        %v306 = vpop.permute.xlu0 %305
        %307 = vrot.lane.b32.xlu0 %v290, 126
        %v308 = vpop.permute.xlu0 %307
        %vm309 = vcmask 1031168
        %v310 = vsel %vm309, %v298, %v300
        %v311 = vsel %vm309, %v300, %v302
        %v312 = vsel %vm309, %v304, %v306
        %v313 = vsel %vm309, %v306, %v308
        %v318 = vadd.f32 %v268, %v310
        %v319 = vadd.f32 %v269, %v311
        %v320 = vadd.f32 %v270, %v312
        %v321 = vadd.f32 %v271, %v313
        %s322 = scalar_lea.vmem %s1, 192
        %v323 = vld [vmem:[%s322] sm:$0xff]
        %v324 = vld [vmem:[%s322 + $0x8] sm:$0xff]
        %326 = vset.pattern.permute.xlu0 0
        %327 = vperm.xlu0 %326, %v323
        %v328 = vpop.permute.xlu0 %327
        %331 = vset.pattern.permute.xlu0 0
        %332 = vperm.xlu0 %331, %v324
        %v333 = vpop.permute.xlu0 %332
        %v335 = vmul.f32 %v328, %v202
        %v336 = vmul.f32 %v328, %v206
        %v337 = vmul.f32 %v328, %v233
        %v338 = vmul.f32 %v333, %v202
        %v339 = vmul.f32 %v333, %v206
        %v340 = vmul.f32 %v333, %v233
        %347 = vrot.lane.b32.xlu0 %v335, 125
        %v348 = vpop.permute.xlu0 %347
        %349 = vrot.lane.b32.xlu0 %v336, 125
        %v350 = vpop.permute.xlu0 %349
        %351 = vrot.lane.b32.xlu0 %v337, 125
        %v352 = vpop.permute.xlu0 %351
        %353 = vrot.lane.b32.xlu0 %v338, 125
        %v354 = vpop.permute.xlu0 %353
        %355 = vrot.lane.b32.xlu0 %v339, 125
        %v356 = vpop.permute.xlu0 %355
        %357 = vrot.lane.b32.xlu0 %v340, 125
        %v358 = vpop.permute.xlu0 %357
        %vm359 = vcmask 1022976
        %v360 = vsel %vm359, %v348, %v350
        %v361 = vsel %vm359, %v350, %v352
        %v362 = vsel %vm359, %v354, %v356
        %v363 = vsel %vm359, %v356, %v358
        %v368 = vadd.f32 %v318, %v360
        %v369 = vadd.f32 %v319, %v361
        %v370 = vadd.f32 %v320, %v362
        %v371 = vadd.f32 %v321, %v363
        %s372 = scalar_lea.vmem %s1, 256
        %v373 = vld [vmem:[%s372] sm:$0xff]
        %v374 = vld [vmem:[%s372 + $0x8] sm:$0xff]
        %376 = vset.pattern.permute.xlu0 0
        %377 = vperm.xlu0 %376, %v373
        %v378 = vpop.permute.xlu0 %377
        %381 = vset.pattern.permute.xlu0 0
        %382 = vperm.xlu0 %381, %v374
        %v383 = vpop.permute.xlu0 %382
        %v385 = vmul.f32 %v378, %v202
        %v386 = vmul.f32 %v378, %v206
        %v387 = vmul.f32 %v378, %v233
        %v388 = vmul.f32 %v383, %v202
        %v389 = vmul.f32 %v383, %v206
        %v390 = vmul.f32 %v383, %v233
        %397 = vrot.lane.b32.xlu0 %v385, 124
        %v398 = vpop.permute.xlu0 %397
        %399 = vrot.lane.b32.xlu0 %v386, 124
        %v400 = vpop.permute.xlu0 %399
        %401 = vrot.lane.b32.xlu0 %v387, 124
        %v402 = vpop.permute.xlu0 %401
        %403 = vrot.lane.b32.xlu0 %v388, 124
        %v404 = vpop.permute.xlu0 %403
        %405 = vrot.lane.b32.xlu0 %v389, 124
        %v406 = vpop.permute.xlu0 %405
        %407 = vrot.lane.b32.xlu0 %v390, 124
        %v408 = vpop.permute.xlu0 %407
        %vm409 = vcmask 1014784
        %v410 = vsel %vm409, %v398, %v400
        %v411 = vsel %vm409, %v400, %v402
        %v412 = vsel %vm409, %v404, %v406
        %v413 = vsel %vm409, %v406, %v408
        %v418 = vadd.f32 %v368, %v410
        %v419 = vadd.f32 %v369, %v411
        %v420 = vadd.f32 %v370, %v412
        %v421 = vadd.f32 %v371, %v413
        %s422 = sadd.s32 %s182, 3
        %s423 = scalar_lea.vmem %s179, %s422
        %v424 = vld [vmem:[%s423] sm:$0x7]
        %s425 = scalar_lea.vmem %s1, 16
        %v426 = vld [vmem:[%s425] sm:$0xff]
        %v427 = vld [vmem:[%s425 + $0x8] sm:$0xff]
        %429 = vset.pattern.permute.xlu0 0
        %430 = vperm.xlu0 %429, %v426
        %v431 = vpop.permute.xlu0 %430
        %434 = vset.pattern.permute.xlu0 0
        %435 = vperm.xlu0 %434, %v427
        %v436 = vpop.permute.xlu0 %435
        %v439 = vlaneseq
        %v440 = vshrl.u32 %v439, 7
        %v441 = vsub.s32 0, %v440
        %v442 = vrot.slane %v424, %v441
        %v443 = vlaneseq
        %v444 = vshrl.u32 %v443, 7
        %v445 = vsub.s32 1, %v444
        %v446 = vrot.slane %v424, %v445
        %v449 = vmul.f32 %v431, %v442
        %v450 = vmul.f32 %v431, %v446
        %v451 = vmul.f32 %v436, %v442
        %v452 = vmul.f32 %v436, %v446
        %v453 = vadd.f32 %v418, %v449
        %v454 = vadd.f32 %v419, %v450
        %v455 = vadd.f32 %v420, %v451
        %v456 = vadd.f32 %v421, %v452
        %s457 = scalar_lea.vmem %s1, 80
        %v458 = vld [vmem:[%s457] sm:$0xff]
        %v459 = vld [vmem:[%s457 + $0x8] sm:$0xff]
        %461 = vset.pattern.permute.xlu0 0
        %462 = vperm.xlu0 %461, %v458
        %v463 = vpop.permute.xlu0 %462
        %466 = vset.pattern.permute.xlu0 0
        %467 = vperm.xlu0 %466, %v459
        %v468 = vpop.permute.xlu0 %467
        %v470 = vlaneseq
        %v471 = vshrl.u32 %v470, 7
        %v472 = vsub.s32 2, %v471
        %v473 = vrot.slane %v424, %v472
        %v475 = vmul.f32 %v463, %v442
        %v476 = vmul.f32 %v463, %v446
        %v477 = vmul.f32 %v463, %v473
        %v478 = vmul.f32 %v468, %v442
        %v479 = vmul.f32 %v468, %v446
        %v480 = vmul.f32 %v468, %v473
        %487 = vrot.lane.b32.xlu0 %v475, 127
        %v488 = vpop.permute.xlu0 %487
        %489 = vrot.lane.b32.xlu0 %v476, 127
        %v490 = vpop.permute.xlu0 %489
        %491 = vrot.lane.b32.xlu0 %v477, 127
        %v492 = vpop.permute.xlu0 %491
        %493 = vrot.lane.b32.xlu0 %v478, 127
        %v494 = vpop.permute.xlu0 %493
        %495 = vrot.lane.b32.xlu0 %v479, 127
        %v496 = vpop.permute.xlu0 %495
        %497 = vrot.lane.b32.xlu0 %v480, 127
        %v498 = vpop.permute.xlu0 %497
        %v499 = vsel %vm259, %v488, %v490
        %v500 = vsel %vm259, %v490, %v492
        %v501 = vsel %vm259, %v494, %v496
        %v502 = vsel %vm259, %v496, %v498
        %v507 = vadd.f32 %v453, %v499
        %v508 = vadd.f32 %v454, %v500
        %v509 = vadd.f32 %v455, %v501
        %v510 = vadd.f32 %v456, %v502
        %s511 = scalar_lea.vmem %s1, 144
        %v512 = vld [vmem:[%s511] sm:$0xff]
        %v513 = vld [vmem:[%s511 + $0x8] sm:$0xff]
        %515 = vset.pattern.permute.xlu0 0
        %516 = vperm.xlu0 %515, %v512
        %v517 = vpop.permute.xlu0 %516
        %520 = vset.pattern.permute.xlu0 0
        %521 = vperm.xlu0 %520, %v513
        %v522 = vpop.permute.xlu0 %521
        %v524 = vmul.f32 %v517, %v442
        %v525 = vmul.f32 %v517, %v446
        %v526 = vmul.f32 %v517, %v473
        %v527 = vmul.f32 %v522, %v442
        %v528 = vmul.f32 %v522, %v446
        %v529 = vmul.f32 %v522, %v473
        %536 = vrot.lane.b32.xlu0 %v524, 126
        %v537 = vpop.permute.xlu0 %536
        %538 = vrot.lane.b32.xlu0 %v525, 126
        %v539 = vpop.permute.xlu0 %538
        %540 = vrot.lane.b32.xlu0 %v526, 126
        %v541 = vpop.permute.xlu0 %540
        %542 = vrot.lane.b32.xlu0 %v527, 126
        %v543 = vpop.permute.xlu0 %542
        %544 = vrot.lane.b32.xlu0 %v528, 126
        %v545 = vpop.permute.xlu0 %544
        %546 = vrot.lane.b32.xlu0 %v529, 126
        %v547 = vpop.permute.xlu0 %546
        %v548 = vsel %vm309, %v537, %v539
        %v549 = vsel %vm309, %v539, %v541
        %v550 = vsel %vm309, %v543, %v545
        %v551 = vsel %vm309, %v545, %v547
        %v556 = vadd.f32 %v507, %v548
        %v557 = vadd.f32 %v508, %v549
        %v558 = vadd.f32 %v509, %v550
        %v559 = vadd.f32 %v510, %v551
        %s560 = scalar_lea.vmem %s1, 208
        %v561 = vld [vmem:[%s560] sm:$0xff]
        %v562 = vld [vmem:[%s560 + $0x8] sm:$0xff]
        %564 = vset.pattern.permute.xlu0 0
        %565 = vperm.xlu0 %564, %v561
        %v566 = vpop.permute.xlu0 %565
        %569 = vset.pattern.permute.xlu0 0
        %570 = vperm.xlu0 %569, %v562
        %v571 = vpop.permute.xlu0 %570
        %v573 = vmul.f32 %v566, %v442
        %v574 = vmul.f32 %v566, %v446
        %v575 = vmul.f32 %v566, %v473
        %v576 = vmul.f32 %v571, %v442
        %v577 = vmul.f32 %v571, %v446
        %v578 = vmul.f32 %v571, %v473
        %585 = vrot.lane.b32.xlu0 %v573, 125
        %v586 = vpop.permute.xlu0 %585
        %587 = vrot.lane.b32.xlu0 %v574, 125
        %v588 = vpop.permute.xlu0 %587
        %589 = vrot.lane.b32.xlu0 %v575, 125
        %v590 = vpop.permute.xlu0 %589
        %591 = vrot.lane.b32.xlu0 %v576, 125
        %v592 = vpop.permute.xlu0 %591
        %593 = vrot.lane.b32.xlu0 %v577, 125
        %v594 = vpop.permute.xlu0 %593
        %595 = vrot.lane.b32.xlu0 %v578, 125
        %v596 = vpop.permute.xlu0 %595
        %v597 = vsel %vm359, %v586, %v588
        %v598 = vsel %vm359, %v588, %v590
        %v599 = vsel %vm359, %v592, %v594
        %v600 = vsel %vm359, %v594, %v596
        %v605 = vadd.f32 %v556, %v597
        %v606 = vadd.f32 %v557, %v598
        %v607 = vadd.f32 %v558, %v599
        %v608 = vadd.f32 %v559, %v600
        %s609 = scalar_lea.vmem %s1, 272
        %v610 = vld [vmem:[%s609] sm:$0xff]
        %v611 = vld [vmem:[%s609 + $0x8] sm:$0xff]
        %613 = vset.pattern.permute.xlu0 0
        %614 = vperm.xlu0 %613, %v610
        %v615 = vpop.permute.xlu0 %614
        %618 = vset.pattern.permute.xlu0 0
        %619 = vperm.xlu0 %618, %v611
        %v620 = vpop.permute.xlu0 %619
        %v622 = vmul.f32 %v615, %v442
        %v623 = vmul.f32 %v615, %v446
        %v624 = vmul.f32 %v615, %v473
        %v625 = vmul.f32 %v620, %v442
        %v626 = vmul.f32 %v620, %v446
        %v627 = vmul.f32 %v620, %v473
        %634 = vrot.lane.b32.xlu0 %v622, 124
        %v635 = vpop.permute.xlu0 %634
        %636 = vrot.lane.b32.xlu0 %v623, 124
        %v637 = vpop.permute.xlu0 %636
        %638 = vrot.lane.b32.xlu0 %v624, 124
        %v639 = vpop.permute.xlu0 %638
        %640 = vrot.lane.b32.xlu0 %v625, 124
        %v641 = vpop.permute.xlu0 %640
        %642 = vrot.lane.b32.xlu0 %v626, 124
        %v643 = vpop.permute.xlu0 %642
        %644 = vrot.lane.b32.xlu0 %v627, 124
        %v645 = vpop.permute.xlu0 %644
        %v646 = vsel %vm409, %v635, %v637
        %v647 = vsel %vm409, %v637, %v639
        %v648 = vsel %vm409, %v641, %v643
        %v649 = vsel %vm409, %v643, %v645
        %v654 = vadd.f32 %v605, %v646
        %v655 = vadd.f32 %v606, %v647
        %v656 = vadd.f32 %v607, %v648
        %v657 = vadd.f32 %v608, %v649
        %s658 = sadd.s32 %s182, 6
        %s659 = scalar_lea.vmem %s179, %s658
        %v660 = vld [vmem:[%s659] sm:$0x7]
        %s661 = scalar_lea.vmem %s1, 32
        %v662 = vld [vmem:[%s661] sm:$0xff]
        %v663 = vld [vmem:[%s661 + $0x8] sm:$0xff]
        %665 = vset.pattern.permute.xlu0 0
        %666 = vperm.xlu0 %665, %v662
        %v667 = vpop.permute.xlu0 %666
        %670 = vset.pattern.permute.xlu0 0
        %671 = vperm.xlu0 %670, %v663
        %v672 = vpop.permute.xlu0 %671
        %v675 = vlaneseq
        %v676 = vshrl.u32 %v675, 7
        %v677 = vsub.s32 0, %v676
        %v678 = vrot.slane %v660, %v677
        %v679 = vlaneseq
        %v680 = vshrl.u32 %v679, 7
        %v681 = vsub.s32 1, %v680
        %v682 = vrot.slane %v660, %v681
        %v685 = vmul.f32 %v667, %v678
        %v686 = vmul.f32 %v667, %v682
        %v687 = vmul.f32 %v672, %v678
        %v688 = vmul.f32 %v672, %v682
        %v689 = vadd.f32 %v654, %v685
        %v690 = vadd.f32 %v655, %v686
        %v691 = vadd.f32 %v656, %v687
        %v692 = vadd.f32 %v657, %v688
        %s693 = scalar_lea.vmem %s1, 96
        %v694 = vld [vmem:[%s693] sm:$0xff]
        %v695 = vld [vmem:[%s693 + $0x8] sm:$0xff]
        %697 = vset.pattern.permute.xlu0 0
        %698 = vperm.xlu0 %697, %v694
        %v699 = vpop.permute.xlu0 %698
        %702 = vset.pattern.permute.xlu0 0
        %703 = vperm.xlu0 %702, %v695
        %v704 = vpop.permute.xlu0 %703
        %v706 = vlaneseq
        %v707 = vshrl.u32 %v706, 7
        %v708 = vsub.s32 2, %v707
        %v709 = vrot.slane %v660, %v708
        %v711 = vmul.f32 %v699, %v678
        %v712 = vmul.f32 %v699, %v682
        %v713 = vmul.f32 %v699, %v709
        %v714 = vmul.f32 %v704, %v678
        %v715 = vmul.f32 %v704, %v682
        %v716 = vmul.f32 %v704, %v709
        %723 = vrot.lane.b32.xlu0 %v711, 127
        %v724 = vpop.permute.xlu0 %723
        %725 = vrot.lane.b32.xlu0 %v712, 127
        %v726 = vpop.permute.xlu0 %725
        %727 = vrot.lane.b32.xlu0 %v713, 127
        %v728 = vpop.permute.xlu0 %727
        %729 = vrot.lane.b32.xlu0 %v714, 127
        %v730 = vpop.permute.xlu0 %729
        %731 = vrot.lane.b32.xlu0 %v715, 127
        %v732 = vpop.permute.xlu0 %731
        %733 = vrot.lane.b32.xlu0 %v716, 127
        %v734 = vpop.permute.xlu0 %733
        %v735 = vsel %vm259, %v724, %v726
        %v736 = vsel %vm259, %v726, %v728
        %v737 = vsel %vm259, %v730, %v732
        %v738 = vsel %vm259, %v732, %v734
        %v743 = vadd.f32 %v689, %v735
        %v744 = vadd.f32 %v690, %v736
        %v745 = vadd.f32 %v691, %v737
        %v746 = vadd.f32 %v692, %v738
        %s747 = scalar_lea.vmem %s1, 160
        %v748 = vld [vmem:[%s747] sm:$0xff]
        %v749 = vld [vmem:[%s747 + $0x8] sm:$0xff]
        %751 = vset.pattern.permute.xlu0 0
        %752 = vperm.xlu0 %751, %v748
        %v753 = vpop.permute.xlu0 %752
        %756 = vset.pattern.permute.xlu0 0
        %757 = vperm.xlu0 %756, %v749
        %v758 = vpop.permute.xlu0 %757
        %v760 = vmul.f32 %v753, %v678
        %v761 = vmul.f32 %v753, %v682
        %v762 = vmul.f32 %v753, %v709
        %v763 = vmul.f32 %v758, %v678
        %v764 = vmul.f32 %v758, %v682
        %v765 = vmul.f32 %v758, %v709
        %772 = vrot.lane.b32.xlu0 %v760, 126
        %v773 = vpop.permute.xlu0 %772
        %774 = vrot.lane.b32.xlu0 %v761, 126
        %v775 = vpop.permute.xlu0 %774
        %776 = vrot.lane.b32.xlu0 %v762, 126
        %v777 = vpop.permute.xlu0 %776
        %778 = vrot.lane.b32.xlu0 %v763, 126
        %v779 = vpop.permute.xlu0 %778
        %780 = vrot.lane.b32.xlu0 %v764, 126
        %v781 = vpop.permute.xlu0 %780
        %782 = vrot.lane.b32.xlu0 %v765, 126
        %v783 = vpop.permute.xlu0 %782
        %v784 = vsel %vm309, %v773, %v775
        %v785 = vsel %vm309, %v775, %v777
        %v786 = vsel %vm309, %v779, %v781
        %v787 = vsel %vm309, %v781, %v783
        %v792 = vadd.f32 %v743, %v784
        %v793 = vadd.f32 %v744, %v785
        %v794 = vadd.f32 %v745, %v786
        %v795 = vadd.f32 %v746, %v787
        %s796 = scalar_lea.vmem %s1, 224
        %v797 = vld [vmem:[%s796] sm:$0xff]
        %v798 = vld [vmem:[%s796 + $0x8] sm:$0xff]
        %800 = vset.pattern.permute.xlu0 0
        %801 = vperm.xlu0 %800, %v797
        %v802 = vpop.permute.xlu0 %801
        %805 = vset.pattern.permute.xlu0 0
        %806 = vperm.xlu0 %805, %v798
        %v807 = vpop.permute.xlu0 %806
        %v809 = vmul.f32 %v802, %v678
        %v810 = vmul.f32 %v802, %v682
        %v811 = vmul.f32 %v802, %v709
        %v812 = vmul.f32 %v807, %v678
        %v813 = vmul.f32 %v807, %v682
        %v814 = vmul.f32 %v807, %v709
        %821 = vrot.lane.b32.xlu0 %v809, 125
        %v822 = vpop.permute.xlu0 %821
        %823 = vrot.lane.b32.xlu0 %v810, 125
        %v824 = vpop.permute.xlu0 %823
        %825 = vrot.lane.b32.xlu0 %v811, 125
        %v826 = vpop.permute.xlu0 %825
        %827 = vrot.lane.b32.xlu0 %v812, 125
        %v828 = vpop.permute.xlu0 %827
        %829 = vrot.lane.b32.xlu0 %v813, 125
        %v830 = vpop.permute.xlu0 %829
        %831 = vrot.lane.b32.xlu0 %v814, 125
        %v832 = vpop.permute.xlu0 %831
        %v833 = vsel %vm359, %v822, %v824
        %v834 = vsel %vm359, %v824, %v826
        %v835 = vsel %vm359, %v828, %v830
        %v836 = vsel %vm359, %v830, %v832
        %v841 = vadd.f32 %v792, %v833
        %v842 = vadd.f32 %v793, %v834
        %v843 = vadd.f32 %v794, %v835
        %v844 = vadd.f32 %v795, %v836
        %s845 = sadd.s32 %s182, 9
        %s846 = scalar_lea.vmem %s179, %s845
        %v847 = vld [vmem:[%s846] sm:$0x7]
        %s848 = scalar_lea.vmem %s1, 48
        %v849 = vld [vmem:[%s848] sm:$0xff]
        %v850 = vld [vmem:[%s848 + $0x8] sm:$0xff]
        %852 = vset.pattern.permute.xlu0 0
        %853 = vperm.xlu0 %852, %v849
        %v854 = vpop.permute.xlu0 %853
        %857 = vset.pattern.permute.xlu0 0
        %858 = vperm.xlu0 %857, %v850
        %v859 = vpop.permute.xlu0 %858
        %v862 = vlaneseq
        %v863 = vshrl.u32 %v862, 7
        %v864 = vsub.s32 0, %v863
        %v865 = vrot.slane %v847, %v864
        %v866 = vlaneseq
        %v867 = vshrl.u32 %v866, 7
        %v868 = vsub.s32 1, %v867
        %v869 = vrot.slane %v847, %v868
        %v872 = vmul.f32 %v854, %v865
        %v873 = vmul.f32 %v854, %v869
        %v874 = vmul.f32 %v859, %v865
        %v875 = vmul.f32 %v859, %v869
        %v876 = vadd.f32 %v841, %v872
        %v877 = vadd.f32 %v842, %v873
        %v878 = vadd.f32 %v843, %v874
        %v879 = vadd.f32 %v844, %v875
        %s880 = scalar_lea.vmem %s1, 112
        %v881 = vld [vmem:[%s880] sm:$0xff]
        %v882 = vld [vmem:[%s880 + $0x8] sm:$0xff]
        %884 = vset.pattern.permute.xlu0 0
        %885 = vperm.xlu0 %884, %v881
        %v886 = vpop.permute.xlu0 %885
        %889 = vset.pattern.permute.xlu0 0
        %890 = vperm.xlu0 %889, %v882
        %v891 = vpop.permute.xlu0 %890
        %v893 = vlaneseq
        %v894 = vshrl.u32 %v893, 7
        %v895 = vsub.s32 2, %v894
        %v896 = vrot.slane %v847, %v895
        %v898 = vmul.f32 %v886, %v865
        %v899 = vmul.f32 %v886, %v869
        %v900 = vmul.f32 %v886, %v896
        %v901 = vmul.f32 %v891, %v865
        %v902 = vmul.f32 %v891, %v869
        %v903 = vmul.f32 %v891, %v896
        %910 = vrot.lane.b32.xlu0 %v898, 127
        %v911 = vpop.permute.xlu0 %910
        %912 = vrot.lane.b32.xlu0 %v899, 127
        %v913 = vpop.permute.xlu0 %912
        %914 = vrot.lane.b32.xlu0 %v900, 127
        %v915 = vpop.permute.xlu0 %914
        %916 = vrot.lane.b32.xlu0 %v901, 127
        %v917 = vpop.permute.xlu0 %916
        %918 = vrot.lane.b32.xlu0 %v902, 127
        %v919 = vpop.permute.xlu0 %918
        %920 = vrot.lane.b32.xlu0 %v903, 127
        %v921 = vpop.permute.xlu0 %920
        %v922 = vsel %vm259, %v911, %v913
        %v923 = vsel %vm259, %v913, %v915
        %v924 = vsel %vm259, %v917, %v919
        %v925 = vsel %vm259, %v919, %v921
        %v930 = vadd.f32 %v876, %v922
        %v931 = vadd.f32 %v877, %v923
        %v932 = vadd.f32 %v878, %v924
        %v933 = vadd.f32 %v879, %v925
        %s934 = scalar_lea.vmem %s1, 176
        %v935 = vld [vmem:[%s934] sm:$0xff]
        %v936 = vld [vmem:[%s934 + $0x8] sm:$0xff]
        %938 = vset.pattern.permute.xlu0 0
        %939 = vperm.xlu0 %938, %v935
        %v940 = vpop.permute.xlu0 %939
        %943 = vset.pattern.permute.xlu0 0
        %944 = vperm.xlu0 %943, %v936
        %v945 = vpop.permute.xlu0 %944
        %v947 = vmul.f32 %v940, %v865
        %v948 = vmul.f32 %v940, %v869
        %v949 = vmul.f32 %v940, %v896
        %v950 = vmul.f32 %v945, %v865
        %v951 = vmul.f32 %v945, %v869
        %v952 = vmul.f32 %v945, %v896
        %959 = vrot.lane.b32.xlu0 %v947, 126
        %v960 = vpop.permute.xlu0 %959
        %961 = vrot.lane.b32.xlu0 %v948, 126
        %v962 = vpop.permute.xlu0 %961
        %963 = vrot.lane.b32.xlu0 %v949, 126
        %v964 = vpop.permute.xlu0 %963
        %965 = vrot.lane.b32.xlu0 %v950, 126
        %v966 = vpop.permute.xlu0 %965
        %967 = vrot.lane.b32.xlu0 %v951, 126
        %v968 = vpop.permute.xlu0 %967
        %969 = vrot.lane.b32.xlu0 %v952, 126
        %v970 = vpop.permute.xlu0 %969
        %v971 = vsel %vm309, %v960, %v962
        %v972 = vsel %vm309, %v962, %v964
        %v973 = vsel %vm309, %v966, %v968
        %v974 = vsel %vm309, %v968, %v970
        %v979 = vadd.f32 %v930, %v971
        %v980 = vadd.f32 %v931, %v972
        %v981 = vadd.f32 %v932, %v973
        %v982 = vadd.f32 %v933, %v974
        %s983 = scalar_lea.vmem %s1, 240
        %v984 = vld [vmem:[%s983] sm:$0xff]
        %v985 = vld [vmem:[%s983 + $0x8] sm:$0xff]
        %987 = vset.pattern.permute.xlu0 0
        %988 = vperm.xlu0 %987, %v984
        %v989 = vpop.permute.xlu0 %988
        %992 = vset.pattern.permute.xlu0 0
        %993 = vperm.xlu0 %992, %v985
        %v994 = vpop.permute.xlu0 %993
        %v996 = vmul.f32 %v989, %v865
        %v997 = vmul.f32 %v989, %v869
        %v998 = vmul.f32 %v989, %v896
        %v999 = vmul.f32 %v994, %v865
        %v1000 = vmul.f32 %v994, %v869
        %v1001 = vmul.f32 %v994, %v896
        %1008 = vrot.lane.b32.xlu0 %v996, 125
        %v1009 = vpop.permute.xlu0 %1008
        %1010 = vrot.lane.b32.xlu0 %v997, 125
        %v1011 = vpop.permute.xlu0 %1010
        %1012 = vrot.lane.b32.xlu0 %v998, 125
        %v1013 = vpop.permute.xlu0 %1012
        %1014 = vrot.lane.b32.xlu0 %v999, 125
        %v1015 = vpop.permute.xlu0 %1014
        %1016 = vrot.lane.b32.xlu0 %v1000, 125
        %v1017 = vpop.permute.xlu0 %1016
        %1018 = vrot.lane.b32.xlu0 %v1001, 125
        %v1019 = vpop.permute.xlu0 %1018
        %v1020 = vsel %vm359, %v1009, %v1011
        %v1021 = vsel %vm359, %v1011, %v1013
        %v1022 = vsel %vm359, %v1015, %v1017
        %v1023 = vsel %vm359, %v1017, %v1019
        %v1028 = vadd.f32 %v979, %v1020
        %v1029 = vadd.f32 %v980, %v1021
        %v1030 = vadd.f32 %v981, %v1022
        %v1031 = vadd.f32 %v982, %v1023
        %v1032 = vld [vmem:[%s2] sm:$0xff]
        %v1033 = vld [vmem:[%s2 + $0x8] sm:$0xff]
        %1035 = vset.pattern.permute.xlu0 0
        %1036 = vperm.xlu0 %1035, %v1032
        %v1037 = vpop.permute.xlu0 %1036
        %1040 = vset.pattern.permute.xlu0 0
        %1041 = vperm.xlu0 %1040, %v1033
        %v1042 = vpop.permute.xlu0 %1041
        %v1044 = vadd.f32 %v1028, %v1037
        %v1045 = vadd.f32 %v1029, %v1037
        %v1046 = vadd.f32 %v1030, %v1042
        %v1047 = vadd.f32 %v1031, %v1042
        %vm1048 = vcmp.ge.f32.partialorder %v1044, 0.0
        %vm1049 = vcmp.ge.f32.partialorder %v1045, 0.0
        %vm1050 = vcmp.ge.f32.partialorder %v1046, 0.0
        %vm1051 = vcmp.ge.f32.partialorder %v1047, 0.0
        %v1052 = vmul.f32 %v1044, 0.2
        %v1053 = vmul.f32 %v1045, 0.2
        %v1054 = vmul.f32 %v1046, 0.2
        %v1055 = vmul.f32 %v1047, 0.2
        %v1056 = vsel %vm1048, %v1044, %v1052
        %v1057 = vsel %vm1049, %v1045, %v1053
        %v1058 = vsel %vm1050, %v1046, %v1054
        %v1059 = vsel %vm1051, %v1047, %v1055
        %1060 = vst [vmem:[%s175] sm:$0xff] %v1056
        %1061 = vst [vmem:[%s175 + $0x8] sm:$0xff] %v1057
        %1062 = vst [vmem:[%s175 + $0x10] sm:$0xff] %v1058
        %1063 = vst [vmem:[%s175 + $0x18] sm:$0xff] %v1059
        %s1064 = sand.u32 %s107, 1
        %s1065 = scalar_lea.sflag [#allocation3], %s1064
        %s1066 = sand.u32 %s107, 1
        %s1067 = smul.addr %s1066, 32
        %s1068 = scalar_lea.vmem [#allocation2], %s1067
        // Predicated region
        $region33: #{tpu_custom_call.1} parent=31 // pred_check
          %p1069 = pneg %p117
        $region34: #{tpu_custom_call.1} parent=31 // pred_check_branch
          %1071 = sbr.rel (%p1069) target = $region36
        $region35: #{tpu_custom_call.1} parent=31 // pred_region
          %s1072 = smul.u32 2, %s22
          %s1074 = ssub.s32 512, 512
          %1075 = vsyncadd %s1065, %s1074
          %s1076 = smul.addr %s21, 4
          %s1077 = sadd.s32 %s1072, %s1076
          %s1078 = smul.addr %s1077, 128
          %s1079 = scalar_lea.hbm %s3, %s1078
          %s1080 = sshll.u32 %s1068, 4
          %s1081 = int_to_ptr.vmem [resolvable:$true] %s1080
          %1086 = dma.vmem_to_hbm [thread:$0]  %s1081, 512, %s1079, %s1065, 256, 256, 16
        $region36: #{tpu_custom_call.1} parent=31 // pred_fallthru
          _
      $region32: #{tpu_custom_call.1} parent=5 // pred_fallthru
        _
      %p1087 = scmp.le.s32.totalorder 2, %s12
      // Predicated region
      $region37: #{tpu_custom_call.1} parent=5 // pred_check
        %p1088 = pneg %p1087
      $region38: #{tpu_custom_call.1} parent=5 // pred_check_branch
        %1090 = sbr.rel (%p1088) target = $region40
      $region39: #{tpu_custom_call.1} parent=5 // pred_region
        %s1091 = ssub.s32 %s12, 2
        // Predicated region
        $region41: #{tpu_custom_call.1} parent=39 // pred_check
          %p1092 = pneg %p123
        $region42: #{tpu_custom_call.1} parent=39 // pred_check_branch
          %1094 = sbr.rel (%p1092) target = $region44
        $region43: #{tpu_custom_call.1} parent=39 // pred_region
          %s1095 = sand.u32 %s108, 1
          %s1096 = scalar_lea.sflag [#allocation3], %s1095
          %s1097 = sand.u32 %s108, 1
          %s1098 = smul.addr %s1097, 32
          %s1099 = scalar_lea.vmem [#allocation2], %s1098
          %1100 = dma.done %s1096, 512
        $region44: #{tpu_custom_call.1} parent=39 // pred_fallthru
          _
      $region40: #{tpu_custom_call.1} parent=5 // pred_fallthru
        _
    $region6: #{tpu_custom_call.1} parent=1 // loop_footer
      %s16 = sadd.s32 1, %s12
    $region7: #{tpu_custom_call.1} parent=1 // loop_footer_branch
      %11 = sbr.rel target = $region3
    $region8: #{tpu_custom_call.1} parent=1 // loop_exit
      _
    %1101 = vsyncpa [#allocation3], 1
    %s1102 = scalar_lea.sflag [#allocation3], 1
    %1103 = vsyncpa %s1102, 1

</llo_original>
